<compile_context>
chip_gen: v7x
topology: tpu7x:2x2x1
jax: 0.10.0
libtpu: 0.0.40
codegen_flags: <defaults>
</compile_context>

<pallas_src>
import functools

import numpy as np
import jax
import jax.numpy as jnp
from jax.experimental import pallas as pl
from jax.experimental.pallas import tpu as pltpu

# TODO(synk): `config.COLOR_FACTOR` is an external, undefined constant in the
# reference module; fixed here deterministically.
COLOR_FACTOR = 1.0

_HTML_COLORS = [
    '#FFFFFF', '#E4E4E4', '#888888', '#222222', '#FFA7D1', '#E50000',
    '#E59500', '#A06A42', '#E5D900', '#94E044', '#02BE01', '#00E5F0',
    '#0083C7', '#0000EA', '#E04AFF', '#820080',
]


def _html_to_percent_rgb(cs):
    cs = cs.strip().lstrip('#')
    return [int(cs[i:i + 2], 16) / 256 for i in (0, 2, 4)]


def _make_cmap_kc():
    # (16, 3), same values as the torch.Tensor in ColorPixelLoss.__init__
    cmap = np.array([_html_to_percent_rgb(c) for c in _HTML_COLORS],
                    dtype=np.float32)
    # torch `.view(1, 3, 1, -1)` is a row-major reshape (16,3) -> (3,16): the
    # channel-scrambling quirk. Reproduce it, then transpose to [color, chan].
    return cmap.reshape(3, 16).T.copy()            # (16, 3)


# 16 compile-time (c0, c1, c2) triples baked straight into the kernel.
_CMAP_KC = [tuple(float(v) for v in row) for row in _make_cmap_kc()]
# A pixel equal to "color 0": used only to pad unaligned H*W (contributes 0).
_PAD_PIXEL = _make_cmap_kc()[0]                    # (3,) float32


def _combined_loss2_kernel(x_ref, t_ref, color_ref, l1_ref, *,
                           n_rows, tile_rows, chunk_rows):
    # x_ref, t_ref : (3, tile_rows, 128) VMEM blocks (channels, pixel-rows, lanes)
    # color_ref    : (1, 1) per-tile partial sum of min color distances
    # l1_ref       : (1, 1) per-tile partial sum of |output - target|
    ti = pl.program_id(1)
    base_row = ti * tile_rows

    def chunk_sums(x, tg, row_start):
        x = x.astype(jnp.float32)                  # (3, cr, 128)
        tg = tg.astype(jnp.float32)
        cr = x.shape[1]

        # Running min of squared distance to the 16 (view-quirked) colors.
        min_d2 = None
        for (c0, c1, c2) in _CMAP_KC:              # compile-time constants
            d0 = x[0] - c0
            d1 = x[1] - c1
            d2 = x[2] - c2
            dk = d0 * d0 + d1 * d1 + d2 * d2       # (cr, 128)
            min_d2 = dk if min_d2 is None else jnp.minimum(min_d2, dk)
        # sqrt is monotone => sqrt(min(d2)) == min(sqrt(d2)); one sqrt per pixel.
        min_dist = jnp.sqrt(min_d2)                # (cr, 128)

        l1_abs = jnp.abs(x - tg)                   # (3, cr, 128)

        # Row-validity mask for the ragged last row-tile of the grid.
        rows = row_start + jax.lax.broadcasted_iota(jnp.int32, (cr, 128), 0)
        valid = rows < n_rows                      # (cr, 128)

        color_s = jnp.sum(jnp.where(valid, min_dist, 0.0))
        l1_s = jnp.sum(jnp.where(valid, l1_abs, 0.0))
        return color_s, l1_s

    n_full = tile_rows // chunk_rows
    tail = tile_rows % chunk_rows

    if n_full == 1:
        # Simple static path (small inputs / single chunk).
        color_tot, l1_tot = chunk_sums(x_ref[:, 0:chunk_rows, :],
                                       t_ref[:, 0:chunk_rows, :],
                                       base_row)
    else:
        # Chunk the sublane (row) axis so intermediates stay vreg-resident.
        def body(j, carry):
            cs, ls = carry
            off = pl.multiple_of(j * chunk_rows, chunk_rows)
            c_s, l_s = chunk_sums(x_ref[:, pl.ds(off, chunk_rows), :],
                                  t_ref[:, pl.ds(off, chunk_rows), :],
                                  base_row + off)
            return cs + c_s, ls + l_s

        color_tot, l1_tot = jax.lax.fori_loop(
            0, n_full, body,
            (jnp.zeros((), jnp.float32), jnp.zeros((), jnp.float32)))

    if tail:
        off0 = n_full * chunk_rows                 # static
        c_s, l_s = chunk_sums(x_ref[:, off0:off0 + tail, :],
                              t_ref[:, off0:off0 + tail, :],
                              base_row + off0)
        color_tot = color_tot + c_s
        l1_tot = l1_tot + l_s

    color_ref[...] = color_tot.reshape(1, 1)
    l1_ref[...] = l1_tot.reshape(1, 1)


def _round_up(x, m):
    return (x + m - 1) // m * m


@functools.partial(jax.jit, static_argnames=("tile_rows", "chunk_rows"))
def combined_loss2(output, target, *, tile_rows=512, chunk_rows=16):
    """output, target: (B, 3, H, W) float arrays (NCHW, like the torch module)."""
    b, ch, h, w = output.shape
    assert ch == 3, "ColorPixelLoss expects 3-channel NCHW input"
    p = h * w
    n_elems = b * ch * p                           # L1 mean denominator

    x = output.reshape(b, 3, p)                    # free reshape (contiguous)
    t = target.reshape(b, 3, p)

    if p % 128 != 0:
        # Rare unaligned case: pad the pixel axis with a colormap color and an
        # identical target so padded pixels contribute exactly 0 to both terms.
        # TODO(synk): this branch costs one extra HBM copy; aligned H*W is free.
        p_pad = _round_up(p, 128)
        pad = jnp.broadcast_to(
            jnp.asarray(_PAD_PIXEL).astype(x.dtype).reshape(1, 3, 1),
            (b, 3, p_pad - p))
        x = jnp.concatenate([x, pad], axis=2)
        t = jnp.concatenate([t, pad], axis=2)
        p = p_pad

    r = p // 128                                   # pixel rows of 128 lanes
    x = x.reshape(b, 3, r, 128)                    # free reshape
    t = t.reshape(b, 3, r, 128)

    # Rows per grid step: large, (8,128)-aligned unless it spans the full array.
    if tile_rows >= r:
        tm = r
    else:
        tm = min(max(8, (tile_rows // 8) * 8), r)
    n_tiles = pl.cdiv(r, tm)
    cr = min(chunk_rows, tm)                       # rows per in-kernel chunk

    kernel = functools.partial(_combined_loss2_kernel,
                               n_rows=r, tile_rows=tm, chunk_rows=cr)

    color_parts, l1_parts = pl.pallas_call(
        kernel,
        out_shape=(jax.ShapeDtypeStruct((b, n_tiles, 1, 1), jnp.float32),
                   jax.ShapeDtypeStruct((b, n_tiles, 1, 1), jnp.float32)),
        grid_spec=pltpu.PrefetchScalarGridSpec(
            num_scalar_prefetch=0,
            grid=(b, n_tiles),
            in_specs=[
                pl.BlockSpec((None, 3, tm, 128), lambda bi, ti: (bi, 0, ti, 0)),
                pl.BlockSpec((None, 3, tm, 128), lambda bi, ti: (bi, 0, ti, 0)),
            ],
            out_specs=[
                pl.BlockSpec((None, None, 1, 1), lambda bi, ti: (bi, ti, 0, 0)),
                pl.BlockSpec((None, None, 1, 1), lambda bi, ti: (bi, ti, 0, 0)),
            ],
        ),
        compiler_params=pltpu.CompilerParams(
            dimension_semantics=("parallel", "parallel")),
    )(x, t)

    color_loss = COLOR_FACTOR * jnp.sum(color_parts)
    l1_loss = jnp.sum(l1_parts) / n_elems
    return l1_loss + color_loss


def combined_loss2_ref(output, target):
    """Pure-JAX reference mirroring the torch CombinedLoss2 forward exactly."""
    l1 = jnp.mean(jnp.abs(output - target))
    b = output.shape[0]
    cmap = jnp.array([_html_to_percent_rgb(c) for c in _HTML_COLORS],
                     dtype=jnp.float32)                       # (16, 3)
    dist = output.reshape(b, 3, -1, 1) - cmap.reshape(1, 3, 1, -1)  # .view quirk
    norm_dist = jnp.sqrt(jnp.sum(dist * dist, axis=1))
    min_dist = jnp.min(norm_dist, axis=2)
    return l1 + COLOR_FACTOR * jnp.sum(min_dist)


if __name__ == "__main__":
    key = jax.random.PRNGKey(0)
    k1, k2, k3, k4, k5, k6 = jax.random.split(key, 6)

    # Primary small case (single tile, single chunk path).
    output = jax.random.uniform(k1, (2, 3, 16, 16), dtype=jnp.float32)
    target = jax.random.uniform(k2, (2, 3, 16, 16), dtype=jnp.float32)
    loss = combined_loss2(output, target)
    jax.block_until_ready(loss)
    loss_ref = combined_loss2_ref(output, target)
    assert jnp.allclose(loss, loss_ref, rtol=1e-5, atol=1e-5), (loss, loss_ref)

    # Exercise the multi-tile grid, fori_loop chunking, tail chunk and the
    # ragged-row mask (H*W = 1920 -> 15 rows of 128; tiles of 8 rows).
    o2 = jax.random.uniform(k3, (2, 3, 48, 40), dtype=jnp.float32)
    t2 = jax.random.uniform(k4, (2, 3, 48, 40), dtype=jnp.float32)
    l2 = combined_loss2(o2, t2, tile_rows=8, chunk_rows=3)
    jax.block_until_ready(l2)
    l2_ref = combined_loss2_ref(o2, t2)
    assert jnp.allclose(l2, l2_ref, rtol=1e-5, atol=1e-5), (l2, l2_ref)

    # Exercise the unaligned (H*W % 128 != 0) padding path.
    o3 = jax.random.uniform(k5, (1, 3, 10, 10), dtype=jnp.float32)
    t3 = jax.random.uniform(k6, (1, 3, 10, 10), dtype=jnp.float32)
    l3 = combined_loss2(o3, t3)
    jax.block_until_ready(l3)
    l3_ref = combined_loss2_ref(o3, t3)
    assert jnp.allclose(l3, l3_ref, rtol=1e-5, atol=1e-5), (l3, l3_ref)

    print("KERNEL_OK")
</pallas_src>

<mosaic_0001>
module attributes {stable_mosaic.version = 11 : i64} {
  func.func @_combined_loss2_kernel(%arg0: i32, %arg1: i32, %arg2: memref<1x3x2x128xf32, #tpu.memory_space<vmem>>, %arg3: memref<1x3x2x128xf32, #tpu.memory_space<vmem>>, %arg4: memref<1x1x1x1xf32, #tpu.memory_space<vmem>>, %arg5: memref<1x1x1x1xf32, #tpu.memory_space<vmem>>) attributes {dimension_semantics = [#tpu.dimension_semantics<parallel>, #tpu.dimension_semantics<parallel>], iteration_bounds = array<i64: 2, 1>, scalar_prefetch = 0 : i64, scratch_operands = 0 : i64, tpu.core_type = #tpu.core_type<tc>, window_params = [{transform_indices = @transform_0, window_bounds = array<i64: 1, 3, 2, 128>}, {transform_indices = @transform_1, window_bounds = array<i64: 1, 3, 2, 128>}, {transform_indices = @transform_2, window_bounds = array<i64: 1, 1, 1, 1>}, {transform_indices = @transform_3, window_bounds = array<i64: 1, 1, 1, 1>}]} {
    %c2_i32 = arith.constant 2 : i32
    %0 = arith.muli %arg1, %c2_i32 : i32
    %c0 = arith.constant 0 : index
    %c0_0 = arith.constant 0 : index
    %c0_1 = arith.constant 0 : index
    %c0_2 = arith.constant 0 : index
    %1 = vector.load %arg2[%c0, %c0_0, %c0_1, %c0_2] : memref<1x3x2x128xf32, #tpu.memory_space<vmem>>, vector<1x3x2x128xf32>
    %2 = vector.shape_cast %1 : vector<1x3x2x128xf32> to vector<3x2x128xf32>
    %c0_3 = arith.constant 0 : index
    %c0_4 = arith.constant 0 : index
    %c0_5 = arith.constant 0 : index
    %c0_6 = arith.constant 0 : index
    %3 = vector.load %arg3[%c0_3, %c0_4, %c0_5, %c0_6] : memref<1x3x2x128xf32, #tpu.memory_space<vmem>>, vector<1x3x2x128xf32>
    %4 = vector.shape_cast %3 : vector<1x3x2x128xf32> to vector<3x2x128xf32>
    %5 = vector.extract_strided_slice %2 {offsets = [0, 0, 0], sizes = [1, 2, 128], strides = [1, 1, 1]} : vector<3x2x128xf32> to vector<1x2x128xf32>
    %6 = vector.shape_cast %5 : vector<1x2x128xf32> to vector<2x128xf32>
    %cst = arith.constant 0.99609375 : f32
    %7 = vector.broadcast %cst : f32 to vector<2x128xf32>
    %8 = arith.subf %6, %7 : vector<2x128xf32>
    %9 = vector.extract_strided_slice %2 {offsets = [1, 0, 0], sizes = [1, 2, 128], strides = [1, 1, 1]} : vector<3x2x128xf32> to vector<1x2x128xf32>
    %10 = vector.shape_cast %9 : vector<1x2x128xf32> to vector<2x128xf32>
    %cst_7 = arith.constant 0.000000e+00 : f32
    %11 = vector.broadcast %cst_7 : f32 to vector<2x128xf32>
    %12 = arith.subf %10, %11 : vector<2x128xf32>
    %13 = vector.extract_strided_slice %2 {offsets = [2, 0, 0], sizes = [1, 2, 128], strides = [1, 1, 1]} : vector<3x2x128xf32> to vector<1x2x128xf32>
    %14 = vector.shape_cast %13 : vector<1x2x128xf32> to vector<2x128xf32>
    %cst_8 = arith.constant 3.906250e-03 : f32
    %15 = vector.broadcast %cst_8 : f32 to vector<2x128xf32>
    %16 = arith.subf %14, %15 : vector<2x128xf32>
    %17 = arith.mulf %8, %8 : vector<2x128xf32>
    %18 = arith.mulf %12, %12 : vector<2x128xf32>
    %19 = arith.addf %17, %18 : vector<2x128xf32>
    %20 = arith.mulf %16, %16 : vector<2x128xf32>
    %21 = arith.addf %19, %20 : vector<2x128xf32>
    %22 = vector.extract_strided_slice %2 {offsets = [0, 0, 0], sizes = [1, 2, 128], strides = [1, 1, 1]} : vector<3x2x128xf32> to vector<1x2x128xf32>
    %23 = vector.shape_cast %22 : vector<1x2x128xf32> to vector<2x128xf32>
    %cst_9 = arith.constant 0.99609375 : f32
    %24 = vector.broadcast %cst_9 : f32 to vector<2x128xf32>
    %25 = arith.subf %23, %24 : vector<2x128xf32>
    %26 = vector.extract_strided_slice %2 {offsets = [1, 0, 0], sizes = [1, 2, 128], strides = [1, 1, 1]} : vector<3x2x128xf32> to vector<1x2x128xf32>
    %27 = vector.shape_cast %26 : vector<1x2x128xf32> to vector<2x128xf32>
    %cst_10 = arith.constant 0.000000e+00 : f32
    %28 = vector.broadcast %cst_10 : f32 to vector<2x128xf32>
    %29 = arith.subf %27, %28 : vector<2x128xf32>
    %30 = vector.extract_strided_slice %2 {offsets = [2, 0, 0], sizes = [1, 2, 128], strides = [1, 1, 1]} : vector<3x2x128xf32> to vector<1x2x128xf32>
    %31 = vector.shape_cast %30 : vector<1x2x128xf32> to vector<2x128xf32>
    %cst_11 = arith.constant 0.000000e+00 : f32
    %32 = vector.broadcast %cst_11 : f32 to vector<2x128xf32>
    %33 = arith.subf %31, %32 : vector<2x128xf32>
    %34 = arith.mulf %25, %25 : vector<2x128xf32>
    %35 = arith.mulf %29, %29 : vector<2x128xf32>
    %36 = arith.addf %34, %35 : vector<2x128xf32>
    %37 = arith.mulf %33, %33 : vector<2x128xf32>
    %38 = arith.addf %36, %37 : vector<2x128xf32>
    %39 = arith.minimumf %21, %38 : vector<2x128xf32>
    %40 = vector.extract_strided_slice %2 {offsets = [0, 0, 0], sizes = [1, 2, 128], strides = [1, 1, 1]} : vector<3x2x128xf32> to vector<1x2x128xf32>
    %41 = vector.shape_cast %40 : vector<1x2x128xf32> to vector<2x128xf32>
    %cst_12 = arith.constant 0.99609375 : f32
    %42 = vector.broadcast %cst_12 : f32 to vector<2x128xf32>
    %43 = arith.subf %41, %42 : vector<2x128xf32>
    %44 = vector.extract_strided_slice %2 {offsets = [1, 0, 0], sizes = [1, 2, 128], strides = [1, 1, 1]} : vector<3x2x128xf32> to vector<1x2x128xf32>
    %45 = vector.shape_cast %44 : vector<1x2x128xf32> to vector<2x128xf32>
    %cst_13 = arith.constant 0.89453125 : f32
    %46 = vector.broadcast %cst_13 : f32 to vector<2x128xf32>
    %47 = arith.subf %45, %46 : vector<2x128xf32>
    %48 = vector.extract_strided_slice %2 {offsets = [2, 0, 0], sizes = [1, 2, 128], strides = [1, 1, 1]} : vector<3x2x128xf32> to vector<1x2x128xf32>
    %49 = vector.shape_cast %48 : vector<1x2x128xf32> to vector<2x128xf32>
    %cst_14 = arith.constant 0.89453125 : f32
    %50 = vector.broadcast %cst_14 : f32 to vector<2x128xf32>
    %51 = arith.subf %49, %50 : vector<2x128xf32>
    %52 = arith.mulf %43, %43 : vector<2x128xf32>
    %53 = arith.mulf %47, %47 : vector<2x128xf32>
    %54 = arith.addf %52, %53 : vector<2x128xf32>
    %55 = arith.mulf %51, %51 : vector<2x128xf32>
    %56 = arith.addf %54, %55 : vector<2x128xf32>
    %57 = arith.minimumf %39, %56 : vector<2x128xf32>
    %58 = vector.extract_strided_slice %2 {offsets = [0, 0, 0], sizes = [1, 2, 128], strides = [1, 1, 1]} : vector<3x2x128xf32> to vector<1x2x128xf32>
    %59 = vector.shape_cast %58 : vector<1x2x128xf32> to vector<2x128xf32>
    %cst_15 = arith.constant 8.906250e-01 : f32
    %60 = vector.broadcast %cst_15 : f32 to vector<2x128xf32>
    %61 = arith.subf %59, %60 : vector<2x128xf32>
    %62 = vector.extract_strided_slice %2 {offsets = [1, 0, 0], sizes = [1, 2, 128], strides = [1, 1, 1]} : vector<3x2x128xf32> to vector<1x2x128xf32>
    %63 = vector.shape_cast %62 : vector<1x2x128xf32> to vector<2x128xf32>
    %cst_16 = arith.constant 0.58203125 : f32
    %64 = vector.broadcast %cst_16 : f32 to vector<2x128xf32>
    %65 = arith.subf %63, %64 : vector<2x128xf32>
    %66 = vector.extract_strided_slice %2 {offsets = [2, 0, 0], sizes = [1, 2, 128], strides = [1, 1, 1]} : vector<3x2x128xf32> to vector<1x2x128xf32>
    %67 = vector.shape_cast %66 : vector<1x2x128xf32> to vector<2x128xf32>
    %cst_17 = arith.constant 9.375000e-01 : f32
    %68 = vector.broadcast %cst_17 : f32 to vector<2x128xf32>
    %69 = arith.subf %67, %68 : vector<2x128xf32>
    %70 = arith.mulf %61, %61 : vector<2x128xf32>
    %71 = arith.mulf %65, %65 : vector<2x128xf32>
    %72 = arith.addf %70, %71 : vector<2x128xf32>
    %73 = arith.mulf %69, %69 : vector<2x128xf32>
    %74 = arith.addf %72, %73 : vector<2x128xf32>
    %75 = arith.minimumf %57, %74 : vector<2x128xf32>
    %76 = vector.extract_strided_slice %2 {offsets = [0, 0, 0], sizes = [1, 2, 128], strides = [1, 1, 1]} : vector<3x2x128xf32> to vector<1x2x128xf32>
    %77 = vector.shape_cast %76 : vector<1x2x128xf32> to vector<2x128xf32>
    %cst_18 = arith.constant 8.906250e-01 : f32
    %78 = vector.broadcast %cst_18 : f32 to vector<2x128xf32>
    %79 = arith.subf %77, %78 : vector<2x128xf32>
    %80 = vector.extract_strided_slice %2 {offsets = [1, 0, 0], sizes = [1, 2, 128], strides = [1, 1, 1]} : vector<3x2x128xf32> to vector<1x2x128xf32>
    %81 = vector.shape_cast %80 : vector<1x2x128xf32> to vector<2x128xf32>
    %cst_19 = arith.constant 0.000000e+00 : f32
    %82 = vector.broadcast %cst_19 : f32 to vector<2x128xf32>
    %83 = arith.subf %81, %82 : vector<2x128xf32>
    %84 = vector.extract_strided_slice %2 {offsets = [2, 0, 0], sizes = [1, 2, 128], strides = [1, 1, 1]} : vector<3x2x128xf32> to vector<1x2x128xf32>
    %85 = vector.shape_cast %84 : vector<1x2x128xf32> to vector<2x128xf32>
    %cst_20 = arith.constant 0.000000e+00 : f32
    %86 = vector.broadcast %cst_20 : f32 to vector<2x128xf32>
    %87 = arith.subf %85, %86 : vector<2x128xf32>
    %88 = arith.mulf %79, %79 : vector<2x128xf32>
    %89 = arith.mulf %83, %83 : vector<2x128xf32>
    %90 = arith.addf %88, %89 : vector<2x128xf32>
    %91 = arith.mulf %87, %87 : vector<2x128xf32>
    %92 = arith.addf %90, %91 : vector<2x128xf32>
    %93 = arith.minimumf %75, %92 : vector<2x128xf32>
    %94 = vector.extract_strided_slice %2 {offsets = [0, 0, 0], sizes = [1, 2, 128], strides = [1, 1, 1]} : vector<3x2x128xf32> to vector<1x2x128xf32>
    %95 = vector.shape_cast %94 : vector<1x2x128xf32> to vector<2x128xf32>
    %cst_21 = arith.constant 8.906250e-01 : f32
    %96 = vector.broadcast %cst_21 : f32 to vector<2x128xf32>
    %97 = arith.subf %95, %96 : vector<2x128xf32>
    %98 = vector.extract_strided_slice %2 {offsets = [1, 0, 0], sizes = [1, 2, 128], strides = [1, 1, 1]} : vector<3x2x128xf32> to vector<1x2x128xf32>
    %99 = vector.shape_cast %98 : vector<1x2x128xf32> to vector<2x128xf32>
    %cst_22 = arith.constant 6.250000e-01 : f32
    %100 = vector.broadcast %cst_22 : f32 to vector<2x128xf32>
    %101 = arith.subf %99, %100 : vector<2x128xf32>
    %102 = vector.extract_strided_slice %2 {offsets = [2, 0, 0], sizes = [1, 2, 128], strides = [1, 1, 1]} : vector<3x2x128xf32> to vector<1x2x128xf32>
    %103 = vector.shape_cast %102 : vector<1x2x128xf32> to vector<2x128xf32>
    %cst_23 = arith.constant 0.51171875 : f32
    %104 = vector.broadcast %cst_23 : f32 to vector<2x128xf32>
    %105 = arith.subf %103, %104 : vector<2x128xf32>
    %106 = arith.mulf %97, %97 : vector<2x128xf32>
    %107 = arith.mulf %101, %101 : vector<2x128xf32>
    %108 = arith.addf %106, %107 : vector<2x128xf32>
    %109 = arith.mulf %105, %105 : vector<2x128xf32>
    %110 = arith.addf %108, %109 : vector<2x128xf32>
    %111 = arith.minimumf %93, %110 : vector<2x128xf32>
    %112 = vector.extract_strided_slice %2 {offsets = [0, 0, 0], sizes = [1, 2, 128], strides = [1, 1, 1]} : vector<3x2x128xf32> to vector<1x2x128xf32>
    %113 = vector.shape_cast %112 : vector<1x2x128xf32> to vector<2x128xf32>
    %cst_24 = arith.constant 5.312500e-01 : f32
    %114 = vector.broadcast %cst_24 : f32 to vector<2x128xf32>
    %115 = arith.subf %113, %114 : vector<2x128xf32>
    %116 = vector.extract_strided_slice %2 {offsets = [1, 0, 0], sizes = [1, 2, 128], strides = [1, 1, 1]} : vector<3x2x128xf32> to vector<1x2x128xf32>
    %117 = vector.shape_cast %116 : vector<1x2x128xf32> to vector<2x128xf32>
    %cst_25 = arith.constant 0.4140625 : f32
    %118 = vector.broadcast %cst_25 : f32 to vector<2x128xf32>
    %119 = arith.subf %117, %118 : vector<2x128xf32>
    %120 = vector.extract_strided_slice %2 {offsets = [2, 0, 0], sizes = [1, 2, 128], strides = [1, 1, 1]} : vector<3x2x128xf32> to vector<1x2x128xf32>
    %121 = vector.shape_cast %120 : vector<1x2x128xf32> to vector<2x128xf32>
    %cst_26 = arith.constant 0.77734375 : f32
    %122 = vector.broadcast %cst_26 : f32 to vector<2x128xf32>
    %123 = arith.subf %121, %122 : vector<2x128xf32>
    %124 = arith.mulf %115, %115 : vector<2x128xf32>
    %125 = arith.mulf %119, %119 : vector<2x128xf32>
    %126 = arith.addf %124, %125 : vector<2x128xf32>
    %127 = arith.mulf %123, %123 : vector<2x128xf32>
    %128 = arith.addf %126, %127 : vector<2x128xf32>
    %129 = arith.minimumf %111, %128 : vector<2x128xf32>
    %130 = vector.extract_strided_slice %2 {offsets = [0, 0, 0], sizes = [1, 2, 128], strides = [1, 1, 1]} : vector<3x2x128xf32> to vector<1x2x128xf32>
    %131 = vector.shape_cast %130 : vector<1x2x128xf32> to vector<2x128xf32>
    %cst_27 = arith.constant 5.312500e-01 : f32
    %132 = vector.broadcast %cst_27 : f32 to vector<2x128xf32>
    %133 = arith.subf %131, %132 : vector<2x128xf32>
    %134 = vector.extract_strided_slice %2 {offsets = [1, 0, 0], sizes = [1, 2, 128], strides = [1, 1, 1]} : vector<3x2x128xf32> to vector<1x2x128xf32>
    %135 = vector.shape_cast %134 : vector<1x2x128xf32> to vector<2x128xf32>
    %cst_28 = arith.constant 0.2578125 : f32
    %136 = vector.broadcast %cst_28 : f32 to vector<2x128xf32>
    %137 = arith.subf %135, %136 : vector<2x128xf32>
    %138 = vector.extract_strided_slice %2 {offsets = [2, 0, 0], sizes = [1, 2, 128], strides = [1, 1, 1]} : vector<3x2x128xf32> to vector<1x2x128xf32>
    %139 = vector.shape_cast %138 : vector<1x2x128xf32> to vector<2x128xf32>
    %cst_29 = arith.constant 0.000000e+00 : f32
    %140 = vector.broadcast %cst_29 : f32 to vector<2x128xf32>
    %141 = arith.subf %139, %140 : vector<2x128xf32>
    %142 = arith.mulf %133, %133 : vector<2x128xf32>
    %143 = arith.mulf %137, %137 : vector<2x128xf32>
    %144 = arith.addf %142, %143 : vector<2x128xf32>
    %145 = arith.mulf %141, %141 : vector<2x128xf32>
    %146 = arith.addf %144, %145 : vector<2x128xf32>
    %147 = arith.minimumf %129, %146 : vector<2x128xf32>
    %148 = vector.extract_strided_slice %2 {offsets = [0, 0, 0], sizes = [1, 2, 128], strides = [1, 1, 1]} : vector<3x2x128xf32> to vector<1x2x128xf32>
    %149 = vector.shape_cast %148 : vector<1x2x128xf32> to vector<2x128xf32>
    %cst_30 = arith.constant 5.312500e-01 : f32
    %150 = vector.broadcast %cst_30 : f32 to vector<2x128xf32>
    %151 = arith.subf %149, %150 : vector<2x128xf32>
    %152 = vector.extract_strided_slice %2 {offsets = [1, 0, 0], sizes = [1, 2, 128], strides = [1, 1, 1]} : vector<3x2x128xf32> to vector<1x2x128xf32>
    %153 = vector.shape_cast %152 : vector<1x2x128xf32> to vector<2x128xf32>
    %cst_31 = arith.constant 0.89453125 : f32
    %154 = vector.broadcast %cst_31 : f32 to vector<2x128xf32>
    %155 = arith.subf %153, %154 : vector<2x128xf32>
    %156 = vector.extract_strided_slice %2 {offsets = [2, 0, 0], sizes = [1, 2, 128], strides = [1, 1, 1]} : vector<3x2x128xf32> to vector<1x2x128xf32>
    %157 = vector.shape_cast %156 : vector<1x2x128xf32> to vector<2x128xf32>
    %cst_32 = arith.constant 0.000000e+00 : f32
    %158 = vector.broadcast %cst_32 : f32 to vector<2x128xf32>
    %159 = arith.subf %157, %158 : vector<2x128xf32>
    %160 = arith.mulf %151, %151 : vector<2x128xf32>
    %161 = arith.mulf %155, %155 : vector<2x128xf32>
    %162 = arith.addf %160, %161 : vector<2x128xf32>
    %163 = arith.mulf %159, %159 : vector<2x128xf32>
    %164 = arith.addf %162, %163 : vector<2x128xf32>
    %165 = arith.minimumf %147, %164 : vector<2x128xf32>
    %166 = vector.extract_strided_slice %2 {offsets = [0, 0, 0], sizes = [1, 2, 128], strides = [1, 1, 1]} : vector<3x2x128xf32> to vector<1x2x128xf32>
    %167 = vector.shape_cast %166 : vector<1x2x128xf32> to vector<2x128xf32>
    %cst_33 = arith.constant 0.1328125 : f32
    %168 = vector.broadcast %cst_33 : f32 to vector<2x128xf32>
    %169 = arith.subf %167, %168 : vector<2x128xf32>
    %170 = vector.extract_strided_slice %2 {offsets = [1, 0, 0], sizes = [1, 2, 128], strides = [1, 1, 1]} : vector<3x2x128xf32> to vector<1x2x128xf32>
    %171 = vector.shape_cast %170 : vector<1x2x128xf32> to vector<2x128xf32>
    %cst_34 = arith.constant 0.84765625 : f32
    %172 = vector.broadcast %cst_34 : f32 to vector<2x128xf32>
    %173 = arith.subf %171, %172 : vector<2x128xf32>
    %174 = vector.extract_strided_slice %2 {offsets = [2, 0, 0], sizes = [1, 2, 128], strides = [1, 1, 1]} : vector<3x2x128xf32> to vector<1x2x128xf32>
    %175 = vector.shape_cast %174 : vector<1x2x128xf32> to vector<2x128xf32>
    %cst_35 = arith.constant 0.9140625 : f32
    %176 = vector.broadcast %cst_35 : f32 to vector<2x128xf32>
    %177 = arith.subf %175, %176 : vector<2x128xf32>
    %178 = arith.mulf %169, %169 : vector<2x128xf32>
    %179 = arith.mulf %173, %173 : vector<2x128xf32>
    %180 = arith.addf %178, %179 : vector<2x128xf32>
    %181 = arith.mulf %177, %177 : vector<2x128xf32>
    %182 = arith.addf %180, %181 : vector<2x128xf32>
    %183 = arith.minimumf %165, %182 : vector<2x128xf32>
    %184 = vector.extract_strided_slice %2 {offsets = [0, 0, 0], sizes = [1, 2, 128], strides = [1, 1, 1]} : vector<3x2x128xf32> to vector<1x2x128xf32>
    %185 = vector.shape_cast %184 : vector<1x2x128xf32> to vector<2x128xf32>
    %cst_36 = arith.constant 0.1328125 : f32
    %186 = vector.broadcast %cst_36 : f32 to vector<2x128xf32>
    %187 = arith.subf %185, %186 : vector<2x128xf32>
    %188 = vector.extract_strided_slice %2 {offsets = [1, 0, 0], sizes = [1, 2, 128], strides = [1, 1, 1]} : vector<3x2x128xf32> to vector<1x2x128xf32>
    %189 = vector.shape_cast %188 : vector<1x2x128xf32> to vector<2x128xf32>
    %cst_37 = arith.constant 0.000000e+00 : f32
    %190 = vector.broadcast %cst_37 : f32 to vector<2x128xf32>
    %191 = arith.subf %189, %190 : vector<2x128xf32>
    %192 = vector.extract_strided_slice %2 {offsets = [2, 0, 0], sizes = [1, 2, 128], strides = [1, 1, 1]} : vector<3x2x128xf32> to vector<1x2x128xf32>
    %193 = vector.shape_cast %192 : vector<1x2x128xf32> to vector<2x128xf32>
    %cst_38 = arith.constant 8.750000e-01 : f32
    %194 = vector.broadcast %cst_38 : f32 to vector<2x128xf32>
    %195 = arith.subf %193, %194 : vector<2x128xf32>
    %196 = arith.mulf %187, %187 : vector<2x128xf32>
    %197 = arith.mulf %191, %191 : vector<2x128xf32>
    %198 = arith.addf %196, %197 : vector<2x128xf32>
    %199 = arith.mulf %195, %195 : vector<2x128xf32>
    %200 = arith.addf %198, %199 : vector<2x128xf32>
    %201 = arith.minimumf %183, %200 : vector<2x128xf32>
    %202 = vector.extract_strided_slice %2 {offsets = [0, 0, 0], sizes = [1, 2, 128], strides = [1, 1, 1]} : vector<3x2x128xf32> to vector<1x2x128xf32>
    %203 = vector.shape_cast %202 : vector<1x2x128xf32> to vector<2x128xf32>
    %cst_39 = arith.constant 0.1328125 : f32
    %204 = vector.broadcast %cst_39 : f32 to vector<2x128xf32>
    %205 = arith.subf %203, %204 : vector<2x128xf32>
    %206 = vector.extract_strided_slice %2 {offsets = [1, 0, 0], sizes = [1, 2, 128], strides = [1, 1, 1]} : vector<3x2x128xf32> to vector<1x2x128xf32>
    %207 = vector.shape_cast %206 : vector<1x2x128xf32> to vector<2x128xf32>
    %cst_40 = arith.constant 5.781250e-01 : f32
    %208 = vector.broadcast %cst_40 : f32 to vector<2x128xf32>
    %209 = arith.subf %207, %208 : vector<2x128xf32>
    %210 = vector.extract_strided_slice %2 {offsets = [2, 0, 0], sizes = [1, 2, 128], strides = [1, 1, 1]} : vector<3x2x128xf32> to vector<1x2x128xf32>
    %211 = vector.shape_cast %210 : vector<1x2x128xf32> to vector<2x128xf32>
    %cst_41 = arith.constant 0.2890625 : f32
    %212 = vector.broadcast %cst_41 : f32 to vector<2x128xf32>
    %213 = arith.subf %211, %212 : vector<2x128xf32>
    %214 = arith.mulf %205, %205 : vector<2x128xf32>
    %215 = arith.mulf %209, %209 : vector<2x128xf32>
    %216 = arith.addf %214, %215 : vector<2x128xf32>
    %217 = arith.mulf %213, %213 : vector<2x128xf32>
    %218 = arith.addf %216, %217 : vector<2x128xf32>
    %219 = arith.minimumf %201, %218 : vector<2x128xf32>
    %220 = vector.extract_strided_slice %2 {offsets = [0, 0, 0], sizes = [1, 2, 128], strides = [1, 1, 1]} : vector<3x2x128xf32> to vector<1x2x128xf32>
    %221 = vector.shape_cast %220 : vector<1x2x128xf32> to vector<2x128xf32>
    %cst_42 = arith.constant 0.99609375 : f32
    %222 = vector.broadcast %cst_42 : f32 to vector<2x128xf32>
    %223 = arith.subf %221, %222 : vector<2x128xf32>
    %224 = vector.extract_strided_slice %2 {offsets = [1, 0, 0], sizes = [1, 2, 128], strides = [1, 1, 1]} : vector<3x2x128xf32> to vector<1x2x128xf32>
    %225 = vector.shape_cast %224 : vector<1x2x128xf32> to vector<2x128xf32>
    %cst_43 = arith.constant 8.750000e-01 : f32
    %226 = vector.broadcast %cst_43 : f32 to vector<2x128xf32>
    %227 = arith.subf %225, %226 : vector<2x128xf32>
    %228 = vector.extract_strided_slice %2 {offsets = [2, 0, 0], sizes = [1, 2, 128], strides = [1, 1, 1]} : vector<3x2x128xf32> to vector<1x2x128xf32>
    %229 = vector.shape_cast %228 : vector<1x2x128xf32> to vector<2x128xf32>
    %cst_44 = arith.constant 0.99609375 : f32
    %230 = vector.broadcast %cst_44 : f32 to vector<2x128xf32>
    %231 = arith.subf %229, %230 : vector<2x128xf32>
    %232 = arith.mulf %223, %223 : vector<2x128xf32>
    %233 = arith.mulf %227, %227 : vector<2x128xf32>
    %234 = arith.addf %232, %233 : vector<2x128xf32>
    %235 = arith.mulf %231, %231 : vector<2x128xf32>
    %236 = arith.addf %234, %235 : vector<2x128xf32>
    %237 = arith.minimumf %219, %236 : vector<2x128xf32>
    %238 = vector.extract_strided_slice %2 {offsets = [0, 0, 0], sizes = [1, 2, 128], strides = [1, 1, 1]} : vector<3x2x128xf32> to vector<1x2x128xf32>
    %239 = vector.shape_cast %238 : vector<1x2x128xf32> to vector<2x128xf32>
    %cst_45 = arith.constant 0.65234375 : f32
    %240 = vector.broadcast %cst_45 : f32 to vector<2x128xf32>
    %241 = arith.subf %239, %240 : vector<2x128xf32>
    %242 = vector.extract_strided_slice %2 {offsets = [1, 0, 0], sizes = [1, 2, 128], strides = [1, 1, 1]} : vector<3x2x128xf32> to vector<1x2x128xf32>
    %243 = vector.shape_cast %242 : vector<1x2x128xf32> to vector<2x128xf32>
    %cst_46 = arith.constant 2.656250e-01 : f32
    %244 = vector.broadcast %cst_46 : f32 to vector<2x128xf32>
    %245 = arith.subf %243, %244 : vector<2x128xf32>
    %246 = vector.extract_strided_slice %2 {offsets = [2, 0, 0], sizes = [1, 2, 128], strides = [1, 1, 1]} : vector<3x2x128xf32> to vector<1x2x128xf32>
    %247 = vector.shape_cast %246 : vector<1x2x128xf32> to vector<2x128xf32>
    %cst_47 = arith.constant 0.5078125 : f32
    %248 = vector.broadcast %cst_47 : f32 to vector<2x128xf32>
    %249 = arith.subf %247, %248 : vector<2x128xf32>
    %250 = arith.mulf %241, %241 : vector<2x128xf32>
    %251 = arith.mulf %245, %245 : vector<2x128xf32>
    %252 = arith.addf %250, %251 : vector<2x128xf32>
    %253 = arith.mulf %249, %249 : vector<2x128xf32>
    %254 = arith.addf %252, %253 : vector<2x128xf32>
    %255 = arith.minimumf %237, %254 : vector<2x128xf32>
    %256 = vector.extract_strided_slice %2 {offsets = [0, 0, 0], sizes = [1, 2, 128], strides = [1, 1, 1]} : vector<3x2x128xf32> to vector<1x2x128xf32>
    %257 = vector.shape_cast %256 : vector<1x2x128xf32> to vector<2x128xf32>
    %cst_48 = arith.constant 0.81640625 : f32
    %258 = vector.broadcast %cst_48 : f32 to vector<2x128xf32>
    %259 = arith.subf %257, %258 : vector<2x128xf32>
    %260 = vector.extract_strided_slice %2 {offsets = [1, 0, 0], sizes = [1, 2, 128], strides = [1, 1, 1]} : vector<3x2x128xf32> to vector<1x2x128xf32>
    %261 = vector.shape_cast %260 : vector<1x2x128xf32> to vector<2x128xf32>
    %cst_49 = arith.constant 7.812500e-03 : f32
    %262 = vector.broadcast %cst_49 : f32 to vector<2x128xf32>
    %263 = arith.subf %261, %262 : vector<2x128xf32>
    %264 = vector.extract_strided_slice %2 {offsets = [2, 0, 0], sizes = [1, 2, 128], strides = [1, 1, 1]} : vector<3x2x128xf32> to vector<1x2x128xf32>
    %265 = vector.shape_cast %264 : vector<1x2x128xf32> to vector<2x128xf32>
    %cst_50 = arith.constant 0.000000e+00 : f32
    %266 = vector.broadcast %cst_50 : f32 to vector<2x128xf32>
    %267 = arith.subf %265, %266 : vector<2x128xf32>
    %268 = arith.mulf %259, %259 : vector<2x128xf32>
    %269 = arith.mulf %263, %263 : vector<2x128xf32>
    %270 = arith.addf %268, %269 : vector<2x128xf32>
    %271 = arith.mulf %267, %267 : vector<2x128xf32>
    %272 = arith.addf %270, %271 : vector<2x128xf32>
    %273 = arith.minimumf %255, %272 : vector<2x128xf32>
    %274 = vector.extract_strided_slice %2 {offsets = [0, 0, 0], sizes = [1, 2, 128], strides = [1, 1, 1]} : vector<3x2x128xf32> to vector<1x2x128xf32>
    %275 = vector.shape_cast %274 : vector<1x2x128xf32> to vector<2x128xf32>
    %cst_51 = arith.constant 0.89453125 : f32
    %276 = vector.broadcast %cst_51 : f32 to vector<2x128xf32>
    %277 = arith.subf %275, %276 : vector<2x128xf32>
    %278 = vector.extract_strided_slice %2 {offsets = [1, 0, 0], sizes = [1, 2, 128], strides = [1, 1, 1]} : vector<3x2x128xf32> to vector<1x2x128xf32>
    %279 = vector.shape_cast %278 : vector<1x2x128xf32> to vector<2x128xf32>
    %cst_52 = arith.constant 0.7421875 : f32
    %280 = vector.broadcast %cst_52 : f32 to vector<2x128xf32>
    %281 = arith.subf %279, %280 : vector<2x128xf32>
    %282 = vector.extract_strided_slice %2 {offsets = [2, 0, 0], sizes = [1, 2, 128], strides = [1, 1, 1]} : vector<3x2x128xf32> to vector<1x2x128xf32>
    %283 = vector.shape_cast %282 : vector<1x2x128xf32> to vector<2x128xf32>
    %cst_53 = arith.constant 5.000000e-01 : f32
    %284 = vector.broadcast %cst_53 : f32 to vector<2x128xf32>
    %285 = arith.subf %283, %284 : vector<2x128xf32>
    %286 = arith.mulf %277, %277 : vector<2x128xf32>
    %287 = arith.mulf %281, %281 : vector<2x128xf32>
    %288 = arith.addf %286, %287 : vector<2x128xf32>
    %289 = arith.mulf %285, %285 : vector<2x128xf32>
    %290 = arith.addf %288, %289 : vector<2x128xf32>
    %291 = arith.minimumf %273, %290 : vector<2x128xf32>
    %292 = math.sqrt %291 : vector<2x128xf32>
    %293 = arith.subf %2, %4 : vector<3x2x128xf32>
    %294 = math.absf %293 : vector<3x2x128xf32>
    %295 = tpu.iota {dimensions = array<i32: 0>} : vector<2x128xi32>
    %296 = vector.broadcast %0 : i32 to vector<2x128xi32>
    %297 = arith.addi %296, %295 : vector<2x128xi32>
    %c2_i32_54 = arith.constant 2 : i32
    %298 = vector.broadcast %c2_i32_54 : i32 to vector<2x128xi32>
    %299 = arith.cmpi slt, %297, %298 : vector<2x128xi32>
    %cst_55 = arith.constant 0.000000e+00 : f32
    %300 = vector.broadcast %cst_55 : f32 to vector<2x128xf32>
    %301 = arith.select %299, %292, %300 : vector<2x128xi1>, vector<2x128xf32>
    %302 = vector.shape_cast %301 : vector<2x128xf32> to vector<1x2x128xf32>
    %cst_56 = arith.constant dense<0.000000e+00> : vector<1xf32>
    %303 = vector.multi_reduction <add>, %302, %cst_56 [1, 2] : vector<1x2x128xf32> to vector<1xf32>
    %304 = vector.shape_cast %303 : vector<1xf32> to vector<1x1x1xf32>
    %305 = vector.extract %304[0, 0, 0] : f32 from vector<1x1x1xf32>
    %cst_57 = arith.constant 0.000000e+00 : f32
    %306 = vector.shape_cast %299 : vector<2x128xi1> to vector<1x2x128xi1>
    %307 = vector.broadcast %306 : vector<1x2x128xi1> to vector<3x2x128xi1>
    %308 = vector.broadcast %cst_57 : f32 to vector<3x2x128xf32>
    %309 = arith.select %307, %294, %308 : vector<3x2x128xi1>, vector<3x2x128xf32>
    %310 = vector.shape_cast %309 : vector<3x2x128xf32> to vector<1x3x2x128xf32>
    %cst_58 = arith.constant dense<0.000000e+00> : vector<1xf32>
    %311 = vector.multi_reduction <add>, %310, %cst_58 [1, 2, 3] : vector<1x3x2x128xf32> to vector<1xf32>
    %312 = vector.shape_cast %311 : vector<1xf32> to vector<1x1x1x1xf32>
    %313 = vector.extract %312[0, 0, 0, 0] : f32 from vector<1x1x1x1xf32>
    %314 = vector.broadcast %305 : f32 to vector<1x1xf32>
    %c0_59 = arith.constant 0 : index
    %c0_60 = arith.constant 0 : index
    %c0_61 = arith.constant 0 : index
    %c0_62 = arith.constant 0 : index
    %315 = vector.load %arg4[%c0_59, %c0_60, %c0_61, %c0_62] : memref<1x1x1x1xf32, #tpu.memory_space<vmem>>, vector<1x1x1x1xf32>
    %316 = vector.shape_cast %315 : vector<1x1x1x1xf32> to vector<1x1xf32>
    %317 = vector.shape_cast %314 : vector<1x1xf32> to vector<1x1x1x1xf32>
    tpu.vector_store %arg4[%c0_59, %c0_60, %c0_61, %c0_62], %317 {strides = array<i32>} : memref<1x1x1x1xf32, #tpu.memory_space<vmem>>, vector<1x1x1x1xf32>,
    %318 = vector.broadcast %313 : f32 to vector<1x1xf32>
    %c0_63 = arith.constant 0 : index
    %c0_64 = arith.constant 0 : index
    %c0_65 = arith.constant 0 : index
    %c0_66 = arith.constant 0 : index
    %319 = vector.load %arg5[%c0_63, %c0_64, %c0_65, %c0_66] : memref<1x1x1x1xf32, #tpu.memory_space<vmem>>, vector<1x1x1x1xf32>
    %320 = vector.shape_cast %319 : vector<1x1x1x1xf32> to vector<1x1xf32>
    %321 = vector.shape_cast %318 : vector<1x1xf32> to vector<1x1x1x1xf32>
    tpu.vector_store %arg5[%c0_63, %c0_64, %c0_65, %c0_66], %321 {strides = array<i32>} : memref<1x1x1x1xf32, #tpu.memory_space<vmem>>, vector<1x1x1x1xf32>,
    return
  }
  func.func @transform_0(%arg0: i32, %arg1: i32) -> (i32, i32, i32, i32) {
    %c0_i32 = arith.constant 0 : i32
    %c0_i32_0 = arith.constant 0 : i32
    %c0_i32_1 = arith.constant 0 : i32
    return %arg0, %c0_i32, %arg1, %c0_i32_0 : i32, i32, i32, i32
  }
  func.func @transform_1(%arg0: i32, %arg1: i32) -> (i32, i32, i32, i32) {
    %c0_i32 = arith.constant 0 : i32
    %c0_i32_0 = arith.constant 0 : i32
    %c0_i32_1 = arith.constant 0 : i32
    return %arg0, %c0_i32, %arg1, %c0_i32_0 : i32, i32, i32, i32
  }
  func.func @transform_2(%arg0: i32, %arg1: i32) -> (i32, i32, i32, i32) {
    %c0_i32 = arith.constant 0 : i32
    %c0_i32_0 = arith.constant 0 : i32
    %c0_i32_1 = arith.constant 0 : i32
    return %arg0, %arg1, %c0_i32, %c0_i32_0 : i32, i32, i32, i32
  }
  func.func @transform_3(%arg0: i32, %arg1: i32) -> (i32, i32, i32, i32) {
    %c0_i32 = arith.constant 0 : i32
    %c0_i32_0 = arith.constant 0 : i32
    %c0_i32_1 = arith.constant 0 : i32
    return %arg0, %arg1, %c0_i32, %c0_i32_0 : i32, i32, i32, i32
  }
}

</mosaic_0001>

<llo_original>
// kernel: combined_loss2.1
$region0: #{combined_loss2.1}
  #allocation0 [shape = 'u32[]', space=smem, size = 0x4, offset = 0x4, fixed_abs, tag = 'smem constant byte address 0x4 - core index']
  #allocation1 [shape = 'u32[144,128]{1,0:T(1,128)}', space=vmem, size = 0x12000, scoped, tag = 'internal scratch']
  %s0 = inlined_call_operand.vmem [shape: f32[2,3,2,128], index: 0, kind: input, shape index: {}]
  %s1 = inlined_call_operand.vmem [shape: f32[2,3,2,128], index: 1, kind: input, shape index: {}]
  %s2 = inlined_call_operand.vmem [shape: f32[2,1,1,1], index: 2, kind: output, shape index: {0}]
  %s3 = inlined_call_operand.vmem [shape: f32[2,1,1,1], index: 3, kind: output, shape index: {1}]
  %4 = xla_tuple %s2, %s3
  %s5 = sld [smem:[#allocation0]]
  $region49: #{combined_loss2.1} parent=0
    _
  %s7 = ssub.s32 1, %s5
  %s8 = scalar_select 0, %s7, %s5
  loop: start=0, step=1, limit=4
  $region2: #{combined_loss2.1} parent=0 // loop_pre_header
    _
  $region3: #{combined_loss2.1} parent=0 // loop_header
    %s10 = sphi 0, %s14
    %p11 = scmp.ge.s32.totalorder %s10, 4
    %s17 = sphi 0, %s29
    %s18 = sphi 0, %s25
    %s19 = sphi 0, %s17
    %s20 = sphi 0, %s18
    %s21 = sphi 0, %s19
    %s22 = sphi 0, %s20
    %s34 = sphi 0, %s36
    %s37 = sphi 0, %s34
    %s38 = sphi 0, %s37
    %s54 = sphi 0, %s38
    %s62 = sphi 0, %s64
    %s65 = sphi 0, %s62
    %s66 = sphi 0, %s65
    %s82 = sphi 0, %s66
    %s90 = sphi 0, %s92
    %s93 = sphi 0, %s90
    %s94 = sphi 0, %s93
    %s110 = sphi 0, %s94
    %s118 = sphi 0, %s120
    %s121 = sphi 0, %s118
    %s122 = sphi 0, %s121
    %s138 = sphi 0, %s122
  $region4: #{combined_loss2.1} parent=0 // loop_header_branch
    %13 = sbr.rel (%p11) target = $region8
  $region5: #{combined_loss2.1} parent=0 // loop_body
    %s15 = ssub.s32 %s10, 1
    %s16 = ssub.s32 %s10, 2
    %s23 = sadd.s32 1, %s18
    %p24 = scmp.ge.s32.totalorder %s23, 1
    %s25 = scalar_select %p24, 0, %s23
    %s26 = sadd.s32 1, %s17
    %s27 = scalar_select %p24, %s26, %s17
    %p28 = scmp.ge.s32.totalorder %s27, 2
    %s29 = scalar_select %p28, 0, %s27
    %s30 = ssub.s32 %s17, %s29
    %s31 = ssub.s32 %s18, %s25
    %s32 = sor.u32 %s30, %s31
    %p33 = scmp.eq.s32.totalorder %s32, 0
    %s35 = sadd.s32 %s34, 1
    %s36 = scalar_select %p33, %s34, %s35
    %p39 = pneg %p33
    %p40 = scmp.eq.s32.totalorder %s10, 1
    %p41 = por %p39, %p40
    %p42 = scmp.ne.s32.totalorder %s34, %s37
    %p43 = scmp.eq.s32.totalorder %s10, 0
    %p44 = por %p42, %p43
    %p45 = scmp.ne.s32.totalorder %s34, %s37
    %p46 = scmp.eq.s32.totalorder %s15, 1
    %p47 = por %p45, %p46
    %p48 = scmp.ne.s32.totalorder %s37, %s38
    %p49 = scmp.eq.s32.totalorder %s15, 0
    %p50 = por %p48, %p49
    %p51 = scmp.ne.s32.totalorder %s37, %s38
    %p52 = scmp.eq.s32.totalorder %s16, 1
    %p53 = por %p51, %p52
    %p55 = scmp.ne.s32.totalorder %s38, %s54
    %p56 = scmp.eq.s32.totalorder %s16, 0
    %p57 = por %p55, %p56
    %s58 = ssub.s32 %s17, %s29
    %s59 = ssub.s32 %s18, %s25
    %s60 = sor.u32 %s58, %s59
    %p61 = scmp.eq.s32.totalorder %s60, 0
    %s63 = sadd.s32 %s62, 1
    %s64 = scalar_select %p61, %s62, %s63
    %p67 = pneg %p61
    %p68 = scmp.eq.s32.totalorder %s10, 1
    %p69 = por %p67, %p68
    %p70 = scmp.ne.s32.totalorder %s62, %s65
    %p71 = scmp.eq.s32.totalorder %s10, 0
    %p72 = por %p70, %p71
    %p73 = scmp.ne.s32.totalorder %s62, %s65
    %p74 = scmp.eq.s32.totalorder %s15, 1
    %p75 = por %p73, %p74
    %p76 = scmp.ne.s32.totalorder %s65, %s66
    %p77 = scmp.eq.s32.totalorder %s15, 0
    %p78 = por %p76, %p77
    %p79 = scmp.ne.s32.totalorder %s65, %s66
    %p80 = scmp.eq.s32.totalorder %s16, 1
    %p81 = por %p79, %p80
    %p83 = scmp.ne.s32.totalorder %s66, %s82
    %p84 = scmp.eq.s32.totalorder %s16, 0
    %p85 = por %p83, %p84
    %s86 = ssub.s32 %s17, %s29
    %s87 = ssub.s32 %s18, %s25
    %s88 = sor.u32 %s86, %s87
    %p89 = scmp.eq.s32.totalorder %s88, 0
    %s91 = sadd.s32 %s90, 1
    %s92 = scalar_select %p89, %s90, %s91
    %p95 = pneg %p89
    %p96 = scmp.eq.s32.totalorder %s10, 1
    %p97 = por %p95, %p96
    %p98 = scmp.ne.s32.totalorder %s90, %s93
    %p99 = scmp.eq.s32.totalorder %s10, 0
    %p100 = por %p98, %p99
    %p101 = scmp.ne.s32.totalorder %s90, %s93
    %p102 = scmp.eq.s32.totalorder %s15, 1
    %p103 = por %p101, %p102
    %p104 = scmp.ne.s32.totalorder %s93, %s94
    %p105 = scmp.eq.s32.totalorder %s15, 0
    %p106 = por %p104, %p105
    %p107 = scmp.ne.s32.totalorder %s93, %s94
    %p108 = scmp.eq.s32.totalorder %s16, 1
    %p109 = por %p107, %p108
    %p111 = scmp.ne.s32.totalorder %s94, %s110
    %p112 = scmp.eq.s32.totalorder %s16, 0
    %p113 = por %p111, %p112
    %s114 = ssub.s32 %s17, %s29
    %s115 = ssub.s32 %s18, %s25
    %s116 = sor.u32 %s114, %s115
    %p117 = scmp.eq.s32.totalorder %s116, 0
    %s119 = sadd.s32 %s118, 1
    %s120 = scalar_select %p117, %s118, %s119
    %p123 = pneg %p117
    %p124 = scmp.eq.s32.totalorder %s10, 1
    %p125 = por %p123, %p124
    %p126 = scmp.ne.s32.totalorder %s118, %s121
    %p127 = scmp.eq.s32.totalorder %s10, 0
    %p128 = por %p126, %p127
    %p129 = scmp.ne.s32.totalorder %s118, %s121
    %p130 = scmp.eq.s32.totalorder %s15, 1
    %p131 = por %p129, %p130
    %p132 = scmp.ne.s32.totalorder %s121, %s122
    %p133 = scmp.eq.s32.totalorder %s15, 0
    %p134 = por %p132, %p133
    %p135 = scmp.ne.s32.totalorder %s121, %s122
    %p136 = scmp.eq.s32.totalorder %s16, 1
    %p137 = por %p135, %p136
    %p139 = scmp.ne.s32.totalorder %s122, %s138
    %p140 = scmp.eq.s32.totalorder %s16, 0
    %p141 = por %p139, %p140
    %p142 = scmp.le.s32.totalorder 1, %s10
    %p143 = scmp.lt.s32.totalorder %s10, 3
    %p144 = pnand %p142, %p143
    %p145 = pneg %p144
    // Predicated region
    $region9: #{combined_loss2.1} parent=5 // pred_check
      _
    $region10: #{combined_loss2.1} parent=5 // pred_check_branch
      %147 = sbr.rel (%p144) target = $region12
    $region11: #{combined_loss2.1} parent=5 // pred_region
      %s148 = ssub.s32 %s10, 1
    $region12: #{combined_loss2.1} parent=5 // pred_fallthru
      _
    %p149 = scmp.lt.s32.totalorder %s10, 2
    // Predicated region
    $region13: #{combined_loss2.1} parent=5 // pred_check
      %p150 = pneg %p149
    $region14: #{combined_loss2.1} parent=5 // pred_check_branch
      %152 = sbr.rel (%p150) target = $region16
    $region15: #{combined_loss2.1} parent=5 // pred_region
      // Predicated region
      $region17: #{combined_loss2.1} parent=15 // pred_check
        %p153 = pneg %p44
      $region18: #{combined_loss2.1} parent=15 // pred_check_branch
        %155 = sbr.rel (%p153) target = $region20
      $region19: #{combined_loss2.1} parent=15 // pred_region
        %p156 = scmp.lt.s32.totalorder %s17, 1
        %s157 = scalar_select %p156, %s17, 1
        %p158 = scmp.lt.s32.totalorder %s18, 0
        %s159 = scalar_select %p158, %s18, 0
        %s160 = smul.addr %s157, 3
        %s161 = sadd.s32 %s159, %s160
        %s162 = smul.addr %s161, 2
        %s163 = scalar_lea.vmem %s0, %s162
      $region20: #{combined_loss2.1} parent=15 // pred_fallthru
        _
      // Predicated region
      $region21: #{combined_loss2.1} parent=15 // pred_check
        %p164 = pneg %p72
      $region22: #{combined_loss2.1} parent=15 // pred_check_branch
        %166 = sbr.rel (%p164) target = $region24
      $region23: #{combined_loss2.1} parent=15 // pred_region
        %p167 = scmp.lt.s32.totalorder %s17, 1
        %s168 = scalar_select %p167, %s17, 1
        %p169 = scmp.lt.s32.totalorder %s18, 0
        %s170 = scalar_select %p169, %s18, 0
        %s171 = smul.addr %s168, 3
        %s172 = sadd.s32 %s170, %s171
        %s173 = smul.addr %s172, 2
        %s174 = scalar_lea.vmem %s1, %s173
      $region24: #{combined_loss2.1} parent=15 // pred_fallthru
        _
    $region16: #{combined_loss2.1} parent=5 // pred_fallthru
      _
    %p175 = scmp.le.s32.totalorder 1, %s10
    %p176 = scmp.lt.s32.totalorder %s10, 3
    %p177 = pnand %p175, %p176
    %p178 = pneg %p177
    // Predicated region
    $region25: #{combined_loss2.1} parent=5 // pred_check
      _
    $region26: #{combined_loss2.1} parent=5 // pred_check_branch
      %180 = sbr.rel (%p177) target = $region28
    $region27: #{combined_loss2.1} parent=5 // pred_region
      %s181 = ssub.s32 %s10, 1
      %p182 = scmp.lt.s32.totalorder %s19, 1
      %s183 = scalar_select %p182, %s19, 1
      %p184 = scmp.lt.s32.totalorder %s20, 0
      %s185 = scalar_select %p184, %s20, 0
      %s186 = smul.addr %s183, 3
      %s187 = sadd.s32 %s185, %s186
      %s188 = smul.addr %s187, 2
      %s189 = scalar_lea.vmem %s0, %s188
      %p190 = pneg %p50
      %p191 = pneg %p47
      %p192 = scmp.lt.s32.totalorder %s19, 1
      %s193 = scalar_select %p192, %s19, 1
      %p194 = scmp.lt.s32.totalorder %s20, 0
      %s195 = scalar_select %p194, %s20, 0
      %s196 = smul.addr %s193, 3
      %s197 = sadd.s32 %s195, %s196
      %s198 = smul.addr %s197, 2
      %s199 = scalar_lea.vmem %s1, %s198
      %p200 = pneg %p78
      %p201 = pneg %p75
      %p202 = pneg %p106
      %p203 = pneg %p103
      %p204 = scmp.lt.s32.totalorder %s19, 1
      %s205 = scalar_select %p204, %s19, 1
      %p206 = scmp.lt.s32.totalorder %s20, 0
      %s207 = scalar_select %p206, %s20, 0
      %s208 = sadd.s32 %s207, %s205
      %s209 = scalar_lea.vmem %s2, %s208
      %p210 = pneg %p134
      %p211 = pneg %p131
      %p212 = scmp.lt.s32.totalorder %s19, 1
      %s213 = scalar_select %p212, %s19, 1
      %p214 = scmp.lt.s32.totalorder %s20, 0
      %s215 = scalar_select %p214, %s20, 0
      %s216 = sadd.s32 %s215, %s213
      %s217 = scalar_lea.vmem %s3, %s216
      %p218 = scmp.lt.s32.totalorder %s19, 1
      %s219 = scalar_select %p218, %s19, 1
      %p220 = scmp.lt.s32.totalorder %s20, 0
      %s221 = scalar_select %p220, %s20, 0
      %s222 = smul.addr %s219, 3
      %s223 = sadd.s32 %s221, %s222
      %s224 = smul.addr %s223, 2
      %s225 = scalar_lea.vmem %s0, %s224
      %p226 = scmp.lt.s32.totalorder %s19, 1
      %s227 = scalar_select %p226, %s19, 1
      %p228 = scmp.lt.s32.totalorder %s20, 0
      %s229 = scalar_select %p228, %s20, 0
      %s230 = smul.addr %s227, 3
      %s231 = sadd.s32 %s229, %s230
      %s232 = smul.addr %s231, 2
      %s233 = scalar_lea.vmem %s1, %s232
      %p234 = scmp.lt.s32.totalorder %s19, 1
      %s235 = scalar_select %p234, %s19, 1
      %p236 = scmp.lt.s32.totalorder %s20, 0
      %s237 = scalar_select %p236, %s20, 0
      %s238 = sadd.s32 %s237, %s235
      %s239 = scalar_lea.vmem %s2, %s238
      %p240 = scmp.lt.s32.totalorder %s19, 1
      %s241 = scalar_select %p240, %s19, 1
      %p242 = scmp.lt.s32.totalorder %s20, 0
      %s243 = scalar_select %p242, %s20, 0
      %s244 = sadd.s32 %s243, %s241
      %s245 = scalar_lea.vmem %s3, %s244
      %s246 = smul.u32 %s20, 2
      %v247 = vld [vmem:[%s225] sm:$0x3]
      %v248 = vld [vmem:[%s225 + $0x2] sm:$0x3]
      %v249 = vld [vmem:[%s225 + $0x4] sm:$0x3]
      %v250 = vld [vmem:[%s233] sm:$0x3]
      %v251 = vld [vmem:[%s233 + $0x2] sm:$0x3]
      %v252 = vld [vmem:[%s233 + $0x4] sm:$0x3]
      %v253 = vsub.f32 %v247, 0.99609375
      %v254 = vsub.f32 %v249, 0.00390625
      %v255 = vmul.f32 %v253, %v253
      %v256 = vmul.f32 %v248, %v248
      %v257 = vadd.f32 %v255, %v256
      %v258 = vmul.f32 %v254, %v254
      %v259 = vadd.f32 %v257, %v258
      %v260 = vmul.f32 %v249, %v249
      %v261 = vadd.f32 %v257, %v260
      %v262 = vmin.f32 %v259, %v261
      %v263 = vsub.f32 %v248, 0.89453125
      %v264 = vsub.f32 %v249, 0.89453125
      %v265 = vmul.f32 %v263, %v263
      %v266 = vadd.f32 %v255, %v265
      %v267 = vmul.f32 %v264, %v264
      %v268 = vadd.f32 %v266, %v267
      %v269 = vmin.f32 %v262, %v268
      %v270 = vsub.f32 %v247, 0.890625
      %v271 = vsub.f32 %v248, 0.58203125
      %v272 = vsub.f32 %v249, 0.9375
      %v273 = vmul.f32 %v270, %v270
      %v274 = vmul.f32 %v271, %v271
      %v275 = vadd.f32 %v273, %v274
      %v276 = vmul.f32 %v272, %v272
      %v277 = vadd.f32 %v275, %v276
      %v278 = vmin.f32 %v269, %v277
      %v279 = vadd.f32 %v273, %v256
      %v280 = vadd.f32 %v279, %v260
      %v281 = vmin.f32 %v278, %v280
      %v282 = vsub.f32 %v248, 0.625
      %v283 = vsub.f32 %v249, 0.51171875
      %v284 = vmul.f32 %v282, %v282
      %v285 = vadd.f32 %v273, %v284
      %v286 = vmul.f32 %v283, %v283
      %v287 = vadd.f32 %v285, %v286
      %v288 = vmin.f32 %v281, %v287
      %v289 = vsub.f32 %v247, 0.53125
      %v290 = vsub.f32 %v248, 0.4140625
      %v291 = vsub.f32 %v249, 0.77734375
      %v292 = vmul.f32 %v289, %v289
      %v293 = vmul.f32 %v290, %v290
      %v294 = vadd.f32 %v292, %v293
      %v295 = vmul.f32 %v291, %v291
      %v296 = vadd.f32 %v294, %v295
      %v297 = vmin.f32 %v288, %v296
      %v298 = vsub.f32 %v248, 0.2578125
      %v299 = vmul.f32 %v298, %v298
      %v300 = vadd.f32 %v292, %v299
      %v301 = vadd.f32 %v300, %v260
      %v302 = vmin.f32 %v297, %v301
      %v303 = vadd.f32 %v292, %v265
      %v304 = vadd.f32 %v303, %v260
      %v305 = vmin.f32 %v302, %v304
      %v306 = vsub.f32 %v247, 0.1328125
      %v307 = vsub.f32 %v248, 0.84765625
      %v308 = vsub.f32 %v249, 0.9140625
      %v309 = vmul.f32 %v306, %v306
      %v310 = vmul.f32 %v307, %v307
      %v311 = vadd.f32 %v309, %v310
      %v312 = vmul.f32 %v308, %v308
      %v313 = vadd.f32 %v311, %v312
      %v314 = vmin.f32 %v305, %v313
      %v315 = vsub.f32 %v249, 0.875
      %v316 = vadd.f32 %v309, %v256
      %v317 = vmul.f32 %v315, %v315
      %v318 = vadd.f32 %v316, %v317
      %v319 = vmin.f32 %v314, %v318
      %v320 = vsub.f32 %v248, 0.578125
      %v321 = vsub.f32 %v249, 0.2890625
      %v322 = vmul.f32 %v320, %v320
      %v323 = vadd.f32 %v309, %v322
      %v324 = vmul.f32 %v321, %v321
      %v325 = vadd.f32 %v323, %v324
      %v326 = vmin.f32 %v319, %v325
      %v327 = vsub.f32 %v248, 0.875
      %v328 = vsub.f32 %v249, 0.99609375
      %v329 = vmul.f32 %v327, %v327
      %v330 = vadd.f32 %v255, %v329
      %v331 = vmul.f32 %v328, %v328
      %v332 = vadd.f32 %v330, %v331
      %v333 = vmin.f32 %v326, %v332
      %v334 = vsub.f32 %v247, 0.65234375
      %v335 = vsub.f32 %v248, 0.265625
      %v336 = vsub.f32 %v249, 0.5078125
      %v337 = vmul.f32 %v334, %v334
      %v338 = vmul.f32 %v335, %v335
      %v339 = vadd.f32 %v337, %v338
      %v340 = vmul.f32 %v336, %v336
      %v341 = vadd.f32 %v339, %v340
      %v342 = vmin.f32 %v333, %v341
      %v343 = vsub.f32 %v247, 0.81640625
      %v344 = vsub.f32 %v248, 0.0078125
      %v345 = vmul.f32 %v343, %v343
      %v346 = vmul.f32 %v344, %v344
      %v347 = vadd.f32 %v345, %v346
      %v348 = vadd.f32 %v347, %v260
      %v349 = vmin.f32 %v342, %v348
      %v350 = vsub.f32 %v247, 0.89453125
      %v351 = vsub.f32 %v248, 0.7421875
      %v352 = vsub.f32 %v249, 0.5
      %v353 = vmul.f32 %v350, %v350
      %v354 = vmul.f32 %v351, %v351
      %v355 = vadd.f32 %v353, %v354
      %v356 = vmul.f32 %v352, %v352
      %v357 = vadd.f32 %v355, %v356
      %v358 = vmin.f32 %v349, %v357
      %v359 = vrsqrt.pop %v358
      %v360 = vmul.f32 %v358, %v359
      %vm361 = vcmp.eq.f32.partialorder %v358, inf
      %v362 = vsel %vm361, %v358, %v360
      %vm363 = vcmp.eq.f32.partialorder %v358, 0.0
      %v364 = vand.u32 %v358, 2147483648
      %v365 = vsel %vm363, %v364, %v362
      %v366 = vsub.f32 %v247, %v250
      %v367 = vsub.f32 %v248, %v251
      %v368 = vsub.f32 %v249, %v252
      %v369 = vand.u32 2147483647, %v366
      %v370 = vand.u32 2147483647, %v367
      %v371 = vand.u32 2147483647, %v368
      %v372 = vlaneseq
      %v373 = vshrl.u32 %v372, 7
      %v374 = vstv %s246
      %v375 = vadd.s32 %v374, %v373
      %vm376 = vcmp.lt.s32.totalorder %v375, 2
      %v377 = vsel %vm376, %v365, 0.0
      %vm378 = vcmask 1041408
      %v379 = vsel %vm378, %v377, 0.0
      %380 = vadd.xlane.f32.xlu0 %v379
      %v381 = vpop.xlane.xlu0 %380
      %v382 = vrot.slane %v381, 4
      %v383 = vadd.f32 %v381, %v382
      %v384 = vrot.slane %v383, 2
      %v385 = vadd.f32 %v383, %v384
      %v386 = vrot.slane %v385, 1
      %v387 = vadd.f32 %v385, %v386
      %s388 = vtos %v387
      %v389 = vsel %vm376, 1, 0
      %vm390 = vcmp.eq.s32.totalorder %v389, 1
      %v391 = vsel %vm390, %v369, 0.0
      %v392 = vsel %vm390, %v370, 0.0
      %v393 = vsel %vm390, %v371, 0.0
      %v394 = vsel %vm378, %v391, 0.0
      %v395 = vsel %vm378, %v392, 0.0
      %v396 = vadd.f32 %v394, %v395
      %v397 = vsel %vm378, %v393, 0.0
      %v398 = vadd.f32 %v396, %v397
      %399 = vadd.xlane.f32.xlu0 %v398
      %v400 = vpop.xlane.xlu0 %399
      %v401 = vrot.slane %v400, 4
      %v402 = vadd.f32 %v400, %v401
      %v403 = vrot.slane %v402, 2
      %v404 = vadd.f32 %v402, %v403
      %v405 = vrot.slane %v404, 1
      %v406 = vadd.f32 %v404, %v405
      %s407 = vtos %v406
      %v408 = vstv %s388
      %vm409 = vcmask 0
      %410 = vst.msk [vmem:[%s239] sm:$0x1] %vm409, %v408
      %v411 = vstv %s407
      %412 = vst.msk [vmem:[%s245] sm:$0x1] %vm409, %v411
      %p413 = scmp.lt.s32.totalorder %s19, 1
      %s414 = scalar_select %p413, %s19, 1
      %p415 = scmp.lt.s32.totalorder %s20, 0
      %s416 = scalar_select %p415, %s20, 0
      %s417 = sadd.s32 %s416, %s414
      %s418 = scalar_lea.vmem %s2, %s417
      %p419 = scmp.lt.s32.totalorder %s19, 1
      %s420 = scalar_select %p419, %s19, 1
      %p421 = scmp.lt.s32.totalorder %s20, 0
      %s422 = scalar_select %p421, %s20, 0
      %s423 = sadd.s32 %s422, %s420
      %s424 = scalar_lea.vmem %s3, %s423
      // Predicated region
      $region29: #{combined_loss2.1} parent=27 // pred_check
        %p425 = pneg %p103
      $region30: #{combined_loss2.1} parent=27 // pred_check_branch
        %427 = sbr.rel (%p425) target = $region32
      $region31: #{combined_loss2.1} parent=27 // pred_region
        _
      $region32: #{combined_loss2.1} parent=27 // pred_fallthru
        _
      // Predicated region
      $region33: #{combined_loss2.1} parent=27 // pred_check
        %p428 = pneg %p131
      $region34: #{combined_loss2.1} parent=27 // pred_check_branch
        %430 = sbr.rel (%p428) target = $region36
      $region35: #{combined_loss2.1} parent=27 // pred_region
        _
      $region36: #{combined_loss2.1} parent=27 // pred_fallthru
        _
    $region28: #{combined_loss2.1} parent=5 // pred_fallthru
      _
    %p431 = scmp.le.s32.totalorder 2, %s10
    // Predicated region
    $region37: #{combined_loss2.1} parent=5 // pred_check
      %p432 = pneg %p431
    $region38: #{combined_loss2.1} parent=5 // pred_check_branch
      %434 = sbr.rel (%p432) target = $region40
    $region39: #{combined_loss2.1} parent=5 // pred_region
      %s435 = ssub.s32 %s10, 2
      // Predicated region
      $region41: #{combined_loss2.1} parent=39 // pred_check
        %p436 = pneg %p109
      $region42: #{combined_loss2.1} parent=39 // pred_check_branch
        %438 = sbr.rel (%p436) target = $region44
      $region43: #{combined_loss2.1} parent=39 // pred_region
        %p439 = scmp.lt.s32.totalorder %s21, 1
        %s440 = scalar_select %p439, %s21, 1
        %p441 = scmp.lt.s32.totalorder %s22, 0
        %s442 = scalar_select %p441, %s22, 0
        %s443 = sadd.s32 %s442, %s440
        %s444 = scalar_lea.vmem %s2, %s443
      $region44: #{combined_loss2.1} parent=39 // pred_fallthru
        _
      // Predicated region
      $region45: #{combined_loss2.1} parent=39 // pred_check
        %p445 = pneg %p137
      $region46: #{combined_loss2.1} parent=39 // pred_check_branch
        %447 = sbr.rel (%p445) target = $region48
      $region47: #{combined_loss2.1} parent=39 // pred_region
        %p448 = scmp.lt.s32.totalorder %s21, 1
        %s449 = scalar_select %p448, %s21, 1
        %p450 = scmp.lt.s32.totalorder %s22, 0
        %s451 = scalar_select %p450, %s22, 0
        %s452 = sadd.s32 %s451, %s449
        %s453 = scalar_lea.vmem %s3, %s452
      $region48: #{combined_loss2.1} parent=39 // pred_fallthru
        _
    $region40: #{combined_loss2.1} parent=5 // pred_fallthru
      _
  $region6: #{combined_loss2.1} parent=0 // loop_footer
    %s14 = sadd.s32 1, %s10
  $region7: #{combined_loss2.1} parent=0 // loop_footer_branch
    %9 = sbr.rel target = $region3
  $region8: #{combined_loss2.1} parent=0 // loop_exit
    _

</llo_original>
